<compile_context>
chip_gen: v7x
topology: tpu7x:2x2x1
jax: 0.10.0
libtpu: 0.0.40
codegen_flags: <defaults>
</compile_context>

<pallas_src>
import functools

import jax
import jax.numpy as jnp
from jax import lax
from jax.experimental import pallas as pl
from jax.experimental.pallas import tpu as pltpu


def _linear_conv_kernel(x_ref, w_ref, b_ref, o_ref, xcol_ref, *,
                        k_size, chan, l_in, l_dense, padding, block_n):
    """One block of `block_n` batch rows per grid step.

    x_ref    : (Bt, C, L)          raw (un-padded) input rows for this block
    w_ref    : (F, K*C)            fused (base ‖ correlated) filters, k-major
    b_ref    : (F, 1)              bias column (zeros when bias=False)
    o_ref    : (1, F, Bt*L_dense)  dense (stride-1) conv outputs, lane-dense
    xcol_ref : (K*C, Bt*L_dense)   VMEM scratch: conv column matrix
    """
    # Zero padding is realised by leaving out-of-range columns at 0.
    if padding > 0:
        xcol_ref[...] = jnp.zeros_like(xcol_ref)

    # Assemble the column matrix from shifted windows of the raw input.
    # All offsets / lengths are static Python ints -> plain VMEM copies.
    for b in range(block_n):
        base = b * l_dense
        for k in range(k_size):
            j0 = max(0, padding - k)                     # first valid out col
            j1 = min(l_dense, l_in + padding - k)        # one past last valid
            if j1 <= j0:
                continue
            s0 = k - padding + j0                        # source start (>= 0)
            xcol_ref[k * chan:(k + 1) * chan, base + j0:base + j1] = (
                x_ref[b, :, s0:s0 + (j1 - j0)])

    # One fused conv-as-matmul per step: (F, K*C) @ (K*C, Bt*L_dense).
    # Lane axis is Bt*L_dense (>=128) -> full-width, unmasked stores.
    o_ref[0] = (jnp.dot(w_ref[...], xcol_ref[...],
                        preferred_element_type=jnp.float32) + b_ref[...])


def _pick_batch_block(n, c, l_in, l_dense, f, k):
    """Choose rows-per-step so the matmul/store lane width is >=128 (ideally ~256)."""
    bt = -(-256 // l_dense)                              # target ~256 lanes
    if n < bt:
        bt = max(min(n, bt), -(-128 // l_dense))         # at least 128 lanes
    # Bound VMEM (double-buffered x/out blocks + xcol scratch) and unroll size.
    per_bt = 4 * (2 * c * l_in + 2 * f * l_dense + k * c * l_dense)
    bt = min(bt, max(1, (8 << 20) // per_bt), 64)
    return max(bt, 1)


@functools.partial(jax.jit, static_argnames=("padding", "stride"))
def linear_conv(x, weight, linear_weights, bias=None, *, padding=0, stride=1):
    """x: (N, C, L) f32; weight: (F_half, C, K); linear_weights: (F_rest, F_half)."""
    N, C, L = x.shape
    F_half, Cw, K = weight.shape
    assert Cw == C, "groups != 1 not supported (module calls F.conv1d with groups=1)"
    F_rest, F_half2 = linear_weights.shape
    assert F_half2 == F_half
    F = F_half + F_rest

    L_pad = L + 2 * padding
    L_dense = L_pad - K + 1                    # stride-1 ("dense") output length
    assert L_dense >= 1

    # ---- weight fusion hoisted out of the kernel (one tiny XLA matmul) ----
    w_base = weight.reshape(F_half, C * K)                       # c-major, k-minor
    corr = jnp.dot(linear_weights, w_base,
                   preferred_element_type=jnp.float32)           # (F_rest, C*K)
    w_full = jnp.concatenate([w_base, corr], axis=0).reshape(F, C, K)
    w_kc = jnp.transpose(w_full, (0, 2, 1)).reshape(F, K * C)    # k-major flatten

    b_vec = bias if bias is not None else jnp.zeros((F,), jnp.float32)
    b_col = b_vec.astype(jnp.float32).reshape(F, 1)

    # ---- batch blocking for lane density / VMEM budget ----
    Bt = _pick_batch_block(N, C, L, L_dense, F, K)
    num_blocks = pl.cdiv(N, Bt)
    N_pad = num_blocks * Bt
    if N_pad != N:                       # only the batch tail is ever padded
        x = jnp.pad(x, ((0, N_pad - N), (0, 0), (0, 0)))
    lanes = Bt * L_dense

    kernel = functools.partial(
        _linear_conv_kernel, k_size=K, chan=C, l_in=L,
        l_dense=L_dense, padding=padding, block_n=Bt)

    # Deep grids: triple-buffer the x input (tiny per-step compute can't hide DMA).
    if num_blocks >= 3:
        x_spec = pl.BlockSpec((Bt, C, L), lambda n: (n, 0, 0),
                              pipeline_mode=pl.Buffered(3))
    else:
        x_spec = pl.BlockSpec((Bt, C, L), lambda n: (n, 0, 0))

    flops = 2 * F * (K * C) * (N_pad * L_dense)
    bytes_accessed = 4 * (N_pad * C * L + F * K * C + F + num_blocks * F * lanes)

    out = pl.pallas_call(
        kernel,
        out_shape=jax.ShapeDtypeStruct((num_blocks, F, lanes), jnp.float32),
        grid=(num_blocks,),
        in_specs=[
            x_spec,
            pl.BlockSpec((F, K * C), lambda n: (0, 0)),
            pl.BlockSpec((F, 1), lambda n: (0, 0)),
        ],
        out_specs=pl.BlockSpec((1, F, lanes), lambda n: (n, 0, 0)),
        scratch_shapes=[pltpu.VMEM((K * C, lanes), jnp.float32)],
        compiler_params=pltpu.CompilerParams(
            dimension_semantics=("parallel",),
            vmem_limit_bytes=32 << 20),
        cost_estimate=pl.CostEstimate(
            flops=flops, transcendentals=0, bytes_accessed=bytes_accessed),
    )(x, w_kc, b_col)

    # Lane-dense slab -> PyTorch NCL layout (wrapper-side layout plumbing).
    y = out.reshape(num_blocks, F, Bt, L_dense)
    y = jnp.transpose(y, (0, 2, 1, 3)).reshape(N_pad, F, L_dense)[:N]
    if stride > 1:
        # Dense conv computed in-kernel; strided conv == subsample of dense.
        y = y[:, :, ::stride]
    return y


def _reference(x, weight, linear_weights, bias=None, *, padding, stride):
    """Pure-JAX reference mirroring the PyTorch forward exactly."""
    F_half, C, K = weight.shape
    F_rest = linear_weights.shape[0]
    corr = (linear_weights @ weight.reshape(F_half, C * K)).reshape(F_rest, C, K)
    w_full = jnp.concatenate([weight, corr], axis=0)            # (F, C, K)
    y = lax.conv_general_dilated(
        x, w_full, window_strides=(stride,), padding=[(padding, padding)],
        dimension_numbers=("NCH", "OIH", "NCH"))
    if bias is not None:
        y = y + bias[None, :, None]
    return y


if __name__ == "__main__":
    # module config (defaults: groups=1, bias=False)
    channels, filters, kernel_size = 4, 8, 3
    times = 2
    f_half = filters // times            # 4
    f_rest = filters - f_half            # 4

    key = jax.random.PRNGKey(0)
    k_x, k_w, k_lw = jax.random.split(key, 3)

    # x: (N, C, L) = (2, 4, 16)
    x = jax.random.normal(k_x, (2, channels, 16), dtype=jnp.float32)

    # xavier_uniform_ on weight (F_half, C, K): fan_in=C*K, fan_out=F_half*K
    fan_in = channels * kernel_size
    fan_out = f_half * kernel_size
    bound = (6.0 / (fan_in + fan_out)) ** 0.5
    weight = jax.random.uniform(
        k_w, (f_half, channels, kernel_size),
        minval=-bound, maxval=bound, dtype=jnp.float32)

    # linear_weights ~ U(-0.1, 0.1), shape (F_rest, F_half)
    linear_weights = jax.random.uniform(
        k_lw, (f_rest, f_half), minval=-0.1, maxval=0.1, dtype=jnp.float32)

    # (a) padding=1, stride=1 (main config)
    y = jax.block_until_ready(
        linear_conv(x, weight, linear_weights, padding=1, stride=1))
    y_ref = _reference(x, weight, linear_weights, padding=1, stride=1)
    assert y.shape == (2, filters, 16), y.shape
    assert jnp.allclose(y, y_ref, atol=1e-5, rtol=1e-5), \
        float(jnp.max(jnp.abs(y - y_ref)))

    # (b) padding=1, stride=2 — validates the strided path (dense + subsample)
    y2 = jax.block_until_ready(
        linear_conv(x, weight, linear_weights, padding=1, stride=2))
    y2_ref = _reference(x, weight, linear_weights, padding=1, stride=2)
    assert y2.shape == (2, filters, 8), y2.shape
    assert jnp.allclose(y2, y2_ref, atol=1e-5, rtol=1e-5), \
        float(jnp.max(jnp.abs(y2 - y2_ref)))

    # (c) padding=0, stride=1 — validates the no-padding path
    y3 = jax.block_until_ready(
        linear_conv(x, weight, linear_weights, padding=0, stride=1))
    y3_ref = _reference(x, weight, linear_weights, padding=0, stride=1)
    assert jnp.allclose(y3, y3_ref, atol=1e-5, rtol=1e-5), \
        float(jnp.max(jnp.abs(y3 - y3_ref)))

    print("KERNEL_OK")
</pallas_src>

<mosaic_0001>
module attributes {stable_mosaic.version = 11 : i64} {
  func.func @_linear_conv_kernel(%arg0: i32, %arg1: memref<8x4x16xf32, #tpu.memory_space<vmem>>, %arg2: memref<8x12xf32, #tpu.memory_space<vmem>>, %arg3: memref<8x1xf32, #tpu.memory_space<vmem>>, %arg4: memref<1x8x128xf32, #tpu.memory_space<vmem>>, %arg5: memref<12x128xf32, #tpu.memory_space<vmem>>) attributes {dimension_semantics = [#tpu.dimension_semantics<parallel>], iteration_bounds = array<i64: 1>, scalar_prefetch = 0 : i64, scratch_operands = 1 : i64, tpu.core_type = #tpu.core_type<tc>, window_params = [{transform_indices = @transform_0, window_bounds = array<i64: 8, 4, 16>}, {pipeline_mode = #tpu.pipeline_mode<synchronous>, transform_indices = @transform_1, window_bounds = array<i64: 8, 12>}, {pipeline_mode = #tpu.pipeline_mode<synchronous>, transform_indices = @transform_2, window_bounds = array<i64: 8, 1>}, {transform_indices = @transform_3, window_bounds = array<i64: 1, 8, 128>}]} {
    %cst = arith.constant 0.000000e+00 : f32
    %0 = vector.broadcast %cst : f32 to vector<12x128xf32>
    %c0 = arith.constant 0 : index
    %c0_0 = arith.constant 0 : index
    %1 = vector.load %arg5[%c0, %c0_0] : memref<12x128xf32, #tpu.memory_space<vmem>>, vector<12x128xf32>
    tpu.vector_store %arg5[%c0, %c0_0], %0 {strides = array<i32>} : memref<12x128xf32, #tpu.memory_space<vmem>>, vector<12x128xf32>,
    %c0_1 = arith.constant 0 : index
    %c0_2 = arith.constant 0 : index
    %c0_3 = arith.constant 0 : index
    %2 = vector.load %arg1[%c0_1, %c0_2, %c0_3] : memref<8x4x16xf32, #tpu.memory_space<vmem>>, vector<1x4x15xf32>
    %3 = vector.shape_cast %2 : vector<1x4x15xf32> to vector<4x15xf32>
    %c0_4 = arith.constant 0 : index
    %c1 = arith.constant 1 : index
    %4 = vector.load %arg5[%c0_4, %c1] : memref<12x128xf32, #tpu.memory_space<vmem>>, vector<4x15xf32>
    tpu.vector_store %arg5[%c0_4, %c1], %3 {strides = array<i32>} : memref<12x128xf32, #tpu.memory_space<vmem>>, vector<4x15xf32>,
    %c0_5 = arith.constant 0 : index
    %c0_6 = arith.constant 0 : index
    %c0_7 = arith.constant 0 : index
    %5 = vector.load %arg1[%c0_5, %c0_6, %c0_7] : memref<8x4x16xf32, #tpu.memory_space<vmem>>, vector<1x4x16xf32>
    %6 = vector.shape_cast %5 : vector<1x4x16xf32> to vector<4x16xf32>
    %c4 = arith.constant 4 : index
    %c0_8 = arith.constant 0 : index
    %7 = vector.load %arg5[%c4, %c0_8] : memref<12x128xf32, #tpu.memory_space<vmem>>, vector<4x16xf32>
    tpu.vector_store %arg5[%c4, %c0_8], %6 {strides = array<i32>} : memref<12x128xf32, #tpu.memory_space<vmem>>, vector<4x16xf32>,
    %c0_9 = arith.constant 0 : index
    %c0_10 = arith.constant 0 : index
    %c1_11 = arith.constant 1 : index
    %8 = vector.load %arg1[%c0_9, %c0_10, %c1_11] : memref<8x4x16xf32, #tpu.memory_space<vmem>>, vector<1x4x15xf32>
    %9 = vector.shape_cast %8 : vector<1x4x15xf32> to vector<4x15xf32>
    %c8 = arith.constant 8 : index
    %c0_12 = arith.constant 0 : index
    %10 = vector.load %arg5[%c8, %c0_12] : memref<12x128xf32, #tpu.memory_space<vmem>>, vector<4x15xf32>
    tpu.vector_store %arg5[%c8, %c0_12], %9 {strides = array<i32>} : memref<12x128xf32, #tpu.memory_space<vmem>>, vector<4x15xf32>,
    %c1_13 = arith.constant 1 : index
    %c0_14 = arith.constant 0 : index
    %c0_15 = arith.constant 0 : index
    %11 = vector.load %arg1[%c1_13, %c0_14, %c0_15] : memref<8x4x16xf32, #tpu.memory_space<vmem>>, vector<1x4x15xf32>
    %12 = vector.shape_cast %11 : vector<1x4x15xf32> to vector<4x15xf32>
    %c0_16 = arith.constant 0 : index
    %c17 = arith.constant 17 : index
    %13 = vector.load %arg5[%c0_16, %c17] : memref<12x128xf32, #tpu.memory_space<vmem>>, vector<4x15xf32>
    tpu.vector_store %arg5[%c0_16, %c17], %12 {strides = array<i32>} : memref<12x128xf32, #tpu.memory_space<vmem>>, vector<4x15xf32>,
    %c1_17 = arith.constant 1 : index
    %c0_18 = arith.constant 0 : index
    %c0_19 = arith.constant 0 : index
    %14 = vector.load %arg1[%c1_17, %c0_18, %c0_19] : memref<8x4x16xf32, #tpu.memory_space<vmem>>, vector<1x4x16xf32>
    %15 = vector.shape_cast %14 : vector<1x4x16xf32> to vector<4x16xf32>
    %c4_20 = arith.constant 4 : index
    %c16 = arith.constant 16 : index
    %16 = vector.load %arg5[%c4_20, %c16] : memref<12x128xf32, #tpu.memory_space<vmem>>, vector<4x16xf32>
    tpu.vector_store %arg5[%c4_20, %c16], %15 {strides = array<i32>} : memref<12x128xf32, #tpu.memory_space<vmem>>, vector<4x16xf32>,
    %c1_21 = arith.constant 1 : index
    %c0_22 = arith.constant 0 : index
    %c1_23 = arith.constant 1 : index
    %17 = vector.load %arg1[%c1_21, %c0_22, %c1_23] : memref<8x4x16xf32, #tpu.memory_space<vmem>>, vector<1x4x15xf32>
    %18 = vector.shape_cast %17 : vector<1x4x15xf32> to vector<4x15xf32>
    %c8_24 = arith.constant 8 : index
    %c16_25 = arith.constant 16 : index
    %19 = vector.load %arg5[%c8_24, %c16_25] : memref<12x128xf32, #tpu.memory_space<vmem>>, vector<4x15xf32>
    tpu.vector_store %arg5[%c8_24, %c16_25], %18 {strides = array<i32>} : memref<12x128xf32, #tpu.memory_space<vmem>>, vector<4x15xf32>,
    %c2 = arith.constant 2 : index
    %c0_26 = arith.constant 0 : index
    %c0_27 = arith.constant 0 : index
    %20 = vector.load %arg1[%c2, %c0_26, %c0_27] : memref<8x4x16xf32, #tpu.memory_space<vmem>>, vector<1x4x15xf32>
    %21 = vector.shape_cast %20 : vector<1x4x15xf32> to vector<4x15xf32>
    %c0_28 = arith.constant 0 : index
    %c33 = arith.constant 33 : index
    %22 = vector.load %arg5[%c0_28, %c33] : memref<12x128xf32, #tpu.memory_space<vmem>>, vector<4x15xf32>
    tpu.vector_store %arg5[%c0_28, %c33], %21 {strides = array<i32>} : memref<12x128xf32, #tpu.memory_space<vmem>>, vector<4x15xf32>,
    %c2_29 = arith.constant 2 : index
    %c0_30 = arith.constant 0 : index
    %c0_31 = arith.constant 0 : index
    %23 = vector.load %arg1[%c2_29, %c0_30, %c0_31] : memref<8x4x16xf32, #tpu.memory_space<vmem>>, vector<1x4x16xf32>
    %24 = vector.shape_cast %23 : vector<1x4x16xf32> to vector<4x16xf32>
    %c4_32 = arith.constant 4 : index
    %c32 = arith.constant 32 : index
    %25 = vector.load %arg5[%c4_32, %c32] : memref<12x128xf32, #tpu.memory_space<vmem>>, vector<4x16xf32>
    tpu.vector_store %arg5[%c4_32, %c32], %24 {strides = array<i32>} : memref<12x128xf32, #tpu.memory_space<vmem>>, vector<4x16xf32>,
    %c2_33 = arith.constant 2 : index
    %c0_34 = arith.constant 0 : index
    %c1_35 = arith.constant 1 : index
    %26 = vector.load %arg1[%c2_33, %c0_34, %c1_35] : memref<8x4x16xf32, #tpu.memory_space<vmem>>, vector<1x4x15xf32>
    %27 = vector.shape_cast %26 : vector<1x4x15xf32> to vector<4x15xf32>
    %c8_36 = arith.constant 8 : index
    %c32_37 = arith.constant 32 : index
    %28 = vector.load %arg5[%c8_36, %c32_37] : memref<12x128xf32, #tpu.memory_space<vmem>>, vector<4x15xf32>
    tpu.vector_store %arg5[%c8_36, %c32_37], %27 {strides = array<i32>} : memref<12x128xf32, #tpu.memory_space<vmem>>, vector<4x15xf32>,
    %c3 = arith.constant 3 : index
    %c0_38 = arith.constant 0 : index
    %c0_39 = arith.constant 0 : index
    %29 = vector.load %arg1[%c3, %c0_38, %c0_39] : memref<8x4x16xf32, #tpu.memory_space<vmem>>, vector<1x4x15xf32>
    %30 = vector.shape_cast %29 : vector<1x4x15xf32> to vector<4x15xf32>
    %c0_40 = arith.constant 0 : index
    %c49 = arith.constant 49 : index
    %31 = vector.load %arg5[%c0_40, %c49] : memref<12x128xf32, #tpu.memory_space<vmem>>, vector<4x15xf32>
    tpu.vector_store %arg5[%c0_40, %c49], %30 {strides = array<i32>} : memref<12x128xf32, #tpu.memory_space<vmem>>, vector<4x15xf32>,
    %c3_41 = arith.constant 3 : index
    %c0_42 = arith.constant 0 : index
    %c0_43 = arith.constant 0 : index
    %32 = vector.load %arg1[%c3_41, %c0_42, %c0_43] : memref<8x4x16xf32, #tpu.memory_space<vmem>>, vector<1x4x16xf32>
    %33 = vector.shape_cast %32 : vector<1x4x16xf32> to vector<4x16xf32>
    %c4_44 = arith.constant 4 : index
    %c48 = arith.constant 48 : index
    %34 = vector.load %arg5[%c4_44, %c48] : memref<12x128xf32, #tpu.memory_space<vmem>>, vector<4x16xf32>
    tpu.vector_store %arg5[%c4_44, %c48], %33 {strides = array<i32>} : memref<12x128xf32, #tpu.memory_space<vmem>>, vector<4x16xf32>,
    %c3_45 = arith.constant 3 : index
    %c0_46 = arith.constant 0 : index
    %c1_47 = arith.constant 1 : index
    %35 = vector.load %arg1[%c3_45, %c0_46, %c1_47] : memref<8x4x16xf32, #tpu.memory_space<vmem>>, vector<1x4x15xf32>
    %36 = vector.shape_cast %35 : vector<1x4x15xf32> to vector<4x15xf32>
    %c8_48 = arith.constant 8 : index
    %c48_49 = arith.constant 48 : index
    %37 = vector.load %arg5[%c8_48, %c48_49] : memref<12x128xf32, #tpu.memory_space<vmem>>, vector<4x15xf32>
    tpu.vector_store %arg5[%c8_48, %c48_49], %36 {strides = array<i32>} : memref<12x128xf32, #tpu.memory_space<vmem>>, vector<4x15xf32>,
    %c4_50 = arith.constant 4 : index
    %c0_51 = arith.constant 0 : index
    %c0_52 = arith.constant 0 : index
    %38 = vector.load %arg1[%c4_50, %c0_51, %c0_52] : memref<8x4x16xf32, #tpu.memory_space<vmem>>, vector<1x4x15xf32>
    %39 = vector.shape_cast %38 : vector<1x4x15xf32> to vector<4x15xf32>
    %c0_53 = arith.constant 0 : index
    %c65 = arith.constant 65 : index
    %40 = vector.load %arg5[%c0_53, %c65] : memref<12x128xf32, #tpu.memory_space<vmem>>, vector<4x15xf32>
    tpu.vector_store %arg5[%c0_53, %c65], %39 {strides = array<i32>} : memref<12x128xf32, #tpu.memory_space<vmem>>, vector<4x15xf32>,
    %c4_54 = arith.constant 4 : index
    %c0_55 = arith.constant 0 : index
    %c0_56 = arith.constant 0 : index
    %41 = vector.load %arg1[%c4_54, %c0_55, %c0_56] : memref<8x4x16xf32, #tpu.memory_space<vmem>>, vector<1x4x16xf32>
    %42 = vector.shape_cast %41 : vector<1x4x16xf32> to vector<4x16xf32>
    %c4_57 = arith.constant 4 : index
    %c64 = arith.constant 64 : index
    %43 = vector.load %arg5[%c4_57, %c64] : memref<12x128xf32, #tpu.memory_space<vmem>>, vector<4x16xf32>
    tpu.vector_store %arg5[%c4_57, %c64], %42 {strides = array<i32>} : memref<12x128xf32, #tpu.memory_space<vmem>>, vector<4x16xf32>,
    %c4_58 = arith.constant 4 : index
    %c0_59 = arith.constant 0 : index
    %c1_60 = arith.constant 1 : index
    %44 = vector.load %arg1[%c4_58, %c0_59, %c1_60] : memref<8x4x16xf32, #tpu.memory_space<vmem>>, vector<1x4x15xf32>
    %45 = vector.shape_cast %44 : vector<1x4x15xf32> to vector<4x15xf32>
    %c8_61 = arith.constant 8 : index
    %c64_62 = arith.constant 64 : index
    %46 = vector.load %arg5[%c8_61, %c64_62] : memref<12x128xf32, #tpu.memory_space<vmem>>, vector<4x15xf32>
    tpu.vector_store %arg5[%c8_61, %c64_62], %45 {strides = array<i32>} : memref<12x128xf32, #tpu.memory_space<vmem>>, vector<4x15xf32>,
    %c5 = arith.constant 5 : index
    %c0_63 = arith.constant 0 : index
    %c0_64 = arith.constant 0 : index
    %47 = vector.load %arg1[%c5, %c0_63, %c0_64] : memref<8x4x16xf32, #tpu.memory_space<vmem>>, vector<1x4x15xf32>
    %48 = vector.shape_cast %47 : vector<1x4x15xf32> to vector<4x15xf32>
    %c0_65 = arith.constant 0 : index
    %c81 = arith.constant 81 : index
    %49 = vector.load %arg5[%c0_65, %c81] : memref<12x128xf32, #tpu.memory_space<vmem>>, vector<4x15xf32>
    tpu.vector_store %arg5[%c0_65, %c81], %48 {strides = array<i32>} : memref<12x128xf32, #tpu.memory_space<vmem>>, vector<4x15xf32>,
    %c5_66 = arith.constant 5 : index
    %c0_67 = arith.constant 0 : index
    %c0_68 = arith.constant 0 : index
    %50 = vector.load %arg1[%c5_66, %c0_67, %c0_68] : memref<8x4x16xf32, #tpu.memory_space<vmem>>, vector<1x4x16xf32>
    %51 = vector.shape_cast %50 : vector<1x4x16xf32> to vector<4x16xf32>
    %c4_69 = arith.constant 4 : index
    %c80 = arith.constant 80 : index
    %52 = vector.load %arg5[%c4_69, %c80] : memref<12x128xf32, #tpu.memory_space<vmem>>, vector<4x16xf32>
    tpu.vector_store %arg5[%c4_69, %c80], %51 {strides = array<i32>} : memref<12x128xf32, #tpu.memory_space<vmem>>, vector<4x16xf32>,
    %c5_70 = arith.constant 5 : index
    %c0_71 = arith.constant 0 : index
    %c1_72 = arith.constant 1 : index
    %53 = vector.load %arg1[%c5_70, %c0_71, %c1_72] : memref<8x4x16xf32, #tpu.memory_space<vmem>>, vector<1x4x15xf32>
    %54 = vector.shape_cast %53 : vector<1x4x15xf32> to vector<4x15xf32>
    %c8_73 = arith.constant 8 : index
    %c80_74 = arith.constant 80 : index
    %55 = vector.load %arg5[%c8_73, %c80_74] : memref<12x128xf32, #tpu.memory_space<vmem>>, vector<4x15xf32>
    tpu.vector_store %arg5[%c8_73, %c80_74], %54 {strides = array<i32>} : memref<12x128xf32, #tpu.memory_space<vmem>>, vector<4x15xf32>,
    %c6 = arith.constant 6 : index
    %c0_75 = arith.constant 0 : index
    %c0_76 = arith.constant 0 : index
    %56 = vector.load %arg1[%c6, %c0_75, %c0_76] : memref<8x4x16xf32, #tpu.memory_space<vmem>>, vector<1x4x15xf32>
    %57 = vector.shape_cast %56 : vector<1x4x15xf32> to vector<4x15xf32>
    %c0_77 = arith.constant 0 : index
    %c97 = arith.constant 97 : index
    %58 = vector.load %arg5[%c0_77, %c97] : memref<12x128xf32, #tpu.memory_space<vmem>>, vector<4x15xf32>
    tpu.vector_store %arg5[%c0_77, %c97], %57 {strides = array<i32>} : memref<12x128xf32, #tpu.memory_space<vmem>>, vector<4x15xf32>,
    %c6_78 = arith.constant 6 : index
    %c0_79 = arith.constant 0 : index
    %c0_80 = arith.constant 0 : index
    %59 = vector.load %arg1[%c6_78, %c0_79, %c0_80] : memref<8x4x16xf32, #tpu.memory_space<vmem>>, vector<1x4x16xf32>
    %60 = vector.shape_cast %59 : vector<1x4x16xf32> to vector<4x16xf32>
    %c4_81 = arith.constant 4 : index
    %c96 = arith.constant 96 : index
    %61 = vector.load %arg5[%c4_81, %c96] : memref<12x128xf32, #tpu.memory_space<vmem>>, vector<4x16xf32>
    tpu.vector_store %arg5[%c4_81, %c96], %60 {strides = array<i32>} : memref<12x128xf32, #tpu.memory_space<vmem>>, vector<4x16xf32>,
    %c6_82 = arith.constant 6 : index
    %c0_83 = arith.constant 0 : index
    %c1_84 = arith.constant 1 : index
    %62 = vector.load %arg1[%c6_82, %c0_83, %c1_84] : memref<8x4x16xf32, #tpu.memory_space<vmem>>, vector<1x4x15xf32>
    %63 = vector.shape_cast %62 : vector<1x4x15xf32> to vector<4x15xf32>
    %c8_85 = arith.constant 8 : index
    %c96_86 = arith.constant 96 : index
    %64 = vector.load %arg5[%c8_85, %c96_86] : memref<12x128xf32, #tpu.memory_space<vmem>>, vector<4x15xf32>
    tpu.vector_store %arg5[%c8_85, %c96_86], %63 {strides = array<i32>} : memref<12x128xf32, #tpu.memory_space<vmem>>, vector<4x15xf32>,
    %c7 = arith.constant 7 : index
    %c0_87 = arith.constant 0 : index
    %c0_88 = arith.constant 0 : index
    %65 = vector.load %arg1[%c7, %c0_87, %c0_88] : memref<8x4x16xf32, #tpu.memory_space<vmem>>, vector<1x4x15xf32>
    %66 = vector.shape_cast %65 : vector<1x4x15xf32> to vector<4x15xf32>
    %c0_89 = arith.constant 0 : index
    %c113 = arith.constant 113 : index
    %67 = vector.load %arg5[%c0_89, %c113] : memref<12x128xf32, #tpu.memory_space<vmem>>, vector<4x15xf32>
    tpu.vector_store %arg5[%c0_89, %c113], %66 {strides = array<i32>} : memref<12x128xf32, #tpu.memory_space<vmem>>, vector<4x15xf32>,
    %c7_90 = arith.constant 7 : index
    %c0_91 = arith.constant 0 : index
    %c0_92 = arith.constant 0 : index
    %68 = vector.load %arg1[%c7_90, %c0_91, %c0_92] : memref<8x4x16xf32, #tpu.memory_space<vmem>>, vector<1x4x16xf32>
    %69 = vector.shape_cast %68 : vector<1x4x16xf32> to vector<4x16xf32>
    %c4_93 = arith.constant 4 : index
    %c112 = arith.constant 112 : index
    %70 = vector.load %arg5[%c4_93, %c112] : memref<12x128xf32, #tpu.memory_space<vmem>>, vector<4x16xf32>
    tpu.vector_store %arg5[%c4_93, %c112], %69 {strides = array<i32>} : memref<12x128xf32, #tpu.memory_space<vmem>>, vector<4x16xf32>,
    %c7_94 = arith.constant 7 : index
    %c0_95 = arith.constant 0 : index
    %c1_96 = arith.constant 1 : index
    %71 = vector.load %arg1[%c7_94, %c0_95, %c1_96] : memref<8x4x16xf32, #tpu.memory_space<vmem>>, vector<1x4x15xf32>
    %72 = vector.shape_cast %71 : vector<1x4x15xf32> to vector<4x15xf32>
    %c8_97 = arith.constant 8 : index
    %c112_98 = arith.constant 112 : index
    %73 = vector.load %arg5[%c8_97, %c112_98] : memref<12x128xf32, #tpu.memory_space<vmem>>, vector<4x15xf32>
    tpu.vector_store %arg5[%c8_97, %c112_98], %72 {strides = array<i32>} : memref<12x128xf32, #tpu.memory_space<vmem>>, vector<4x15xf32>,
    %c0_99 = arith.constant 0 : index
    %c0_100 = arith.constant 0 : index
    %74 = vector.load %arg2[%c0_99, %c0_100] : memref<8x12xf32, #tpu.memory_space<vmem>>, vector<8x12xf32>
    %c0_101 = arith.constant 0 : index
    %c0_102 = arith.constant 0 : index
    %75 = vector.load %arg5[%c0_101, %c0_102] : memref<12x128xf32, #tpu.memory_space<vmem>>, vector<12x128xf32>
    %cst_103 = arith.constant dense<0.000000e+00> : vector<8x128xf32>
    %76 = tpu.matmul %74, %75, %cst_103 {dimension_numbers = #tpu.dot_dimension_numbers<[1], [0], [0], [1], [0, 0, 1, 1], [], []>} : vector<8x12xf32>, vector<12x128xf32>, vector<8x128xf32> -> vector<8x128xf32>
    %c0_104 = arith.constant 0 : index
    %c0_105 = arith.constant 0 : index
    %77 = vector.load %arg3[%c0_104, %c0_105] : memref<8x1xf32, #tpu.memory_space<vmem>>, vector<8x1xf32>
    %78 = vector.broadcast %77 : vector<8x1xf32> to vector<8x128xf32>
    %79 = arith.addf %76, %78 : vector<8x128xf32>
    %c0_106 = arith.constant 0 : index
    %c0_107 = arith.constant 0 : index
    %c0_108 = arith.constant 0 : index
    %80 = vector.load %arg4[%c0_106, %c0_107, %c0_108] : memref<1x8x128xf32, #tpu.memory_space<vmem>>, vector<1x8x128xf32>
    %81 = vector.shape_cast %80 : vector<1x8x128xf32> to vector<8x128xf32>
    %82 = vector.shape_cast %79 : vector<8x128xf32> to vector<1x8x128xf32>
    tpu.vector_store %arg4[%c0_106, %c0_107, %c0_108], %82 {strides = array<i32>} : memref<1x8x128xf32, #tpu.memory_space<vmem>>, vector<1x8x128xf32>,
    return
  }
  func.func @transform_0(%arg0: i32) -> (i32, i32, i32) {
    %c0_i32 = arith.constant 0 : i32
    %c0_i32_0 = arith.constant 0 : i32
    %c0_i32_1 = arith.constant 0 : i32
    return %arg0, %c0_i32, %c0_i32_0 : i32, i32, i32
  }
  func.func @transform_1(%arg0: i32) -> (i32, i32) {
    %c0_i32 = arith.constant 0 : i32
    %c0_i32_0 = arith.constant 0 : i32
    %c0_i32_1 = arith.constant 0 : i32
    return %c0_i32, %c0_i32_0 : i32, i32
  }
  func.func @transform_2(%arg0: i32) -> (i32, i32) {
    %c0_i32 = arith.constant 0 : i32
    %c0_i32_0 = arith.constant 0 : i32
    %c0_i32_1 = arith.constant 0 : i32
    return %c0_i32, %c0_i32_0 : i32, i32
  }
  func.func @transform_3(%arg0: i32) -> (i32, i32, i32) {
    %c0_i32 = arith.constant 0 : i32
    %c0_i32_0 = arith.constant 0 : i32
    %c0_i32_1 = arith.constant 0 : i32
    return %arg0, %c0_i32, %c0_i32_0 : i32, i32, i32
  }
}

</mosaic_0001>

<llo_original>
// kernel: linear_conv.1
$region0: #{linear_conv.1}
  #allocation0 [shape = 'u32[]', space=smem, size = 0x4, offset = 0x4, fixed_abs, tag = 'smem constant byte address 0x4 - core index']
  #allocation1 [shape = 'u32[144,128]{1,0:T(1,128)}', space=vmem, size = 0x12000, scoped, tag = 'internal scratch']
  #allocation2 [shape = 'f32[12,128]{1,0:T(8,128)}', space=vmem, size = 0x2000, scoped, tag = 'scratch operand']
  %s0 = inlined_call_operand.vmem [shape: f32[8,4,16], index: 0, kind: input, shape index: {}]
  %s1 = inlined_call_operand.vmem [shape: f32[8,12], index: 1, kind: input, shape index: {}]
  %s2 = inlined_call_operand.vmem [shape: f32[8,1], index: 2, kind: input, shape index: {}]
  %s3 = inlined_call_operand.vmem [shape: f32[1,8,128], index: 3, kind: output, shape index: {}]
  %s4 = sld [smem:[#allocation0]]
  $region22: #{linear_conv.1} parent=0
    _
  %s6 = ssub.s32 1, %s4
  %s7 = scalar_select 0, %s6, %s4
  // Predicated region
  $region2: #{linear_conv.1} parent=0 // pred_check
    _
  $region3: #{linear_conv.1} parent=0 // pred_check_branch
    %9 = sbr.rel (0) target = $region5
  $region4: #{linear_conv.1} parent=0 // pred_region
    _
  $region5: #{linear_conv.1} parent=0 // pred_fallthru
    _
  // Predicated region
  $region6: #{linear_conv.1} parent=0 // pred_check
    _
  $region7: #{linear_conv.1} parent=0 // pred_check_branch
    %11 = sbr.rel (0) target = $region9
  $region8: #{linear_conv.1} parent=0 // pred_region
    _
  $region9: #{linear_conv.1} parent=0 // pred_fallthru
    _
  // Predicated region
  $region10: #{linear_conv.1} parent=0 // pred_check
    _
  $region11: #{linear_conv.1} parent=0 // pred_check_branch
    %13 = sbr.rel (0) target = $region13
  $region12: #{linear_conv.1} parent=0 // pred_region
    _
  $region13: #{linear_conv.1} parent=0 // pred_fallthru
    _
  %14 = vst [vmem:[#allocation2] sm:$0xff] 0.0
  %15 = vst [vmem:[#allocation2 + $0x8] sm:$0xf] 0.0
  %v16 = vld [vmem:[%s0] sm:$0xf]
  %18 = vrot.lane.b32.xlu0 %v16, 1
  %v19 = vpop.permute.xlu0 %18
  %vm21 = vcmask 125960
  %22 = vst.msk [vmem:[#allocation2] sm:$0xf] %vm21, %v19
  %v23 = vld [vmem:[%s0] sm:$0xf]
  %vm24 = vcmask 125952
  %25 = vst.msk [vmem:[#allocation2 + $0x4] sm:$0xf] %vm24, %v23
  %v26 = vld [vmem:[%s0] sm:$0xf]
  %28 = vrot.lane.b32.xlu0 %v26, 127
  %v29 = vpop.permute.xlu0 %28
  %vm31 = vcmask 117760
  %32 = vst.msk [vmem:[#allocation2 + $0x8] sm:$0xf] %vm31, %v29
  %s33 = scalar_lea.vmem %s0, 4
  %v34 = vld [vmem:[%s33] sm:$0xf]
  %36 = vrot.lane.b32.xlu0 %v34, 17
  %v37 = vpop.permute.xlu0 %36
  %vm39 = vcmask 257160
  %40 = vst.msk [vmem:[#allocation2] sm:$0xf] %vm39, %v37
  %v41 = vld [vmem:[%s33] sm:$0xf]
  %43 = vrot.lane.b32.xlu0 %v41, 16
  %v44 = vpop.permute.xlu0 %43
  %vm46 = vcmask 257152
  %47 = vst.msk [vmem:[#allocation2 + $0x4] sm:$0xf] %vm46, %v44
  %v48 = vld [vmem:[%s33] sm:$0xf]
  %50 = vrot.lane.b32.xlu0 %v48, 15
  %v51 = vpop.permute.xlu0 %50
  %vm53 = vcmask 248960
  %54 = vst.msk [vmem:[#allocation2 + $0x8] sm:$0xf] %vm53, %v51
  %s55 = scalar_lea.vmem %s0, 8
  %v56 = vld [vmem:[%s55] sm:$0xf]
  %58 = vrot.lane.b32.xlu0 %v56, 33
  %v59 = vpop.permute.xlu0 %58
  %vm61 = vcmask 388360
  %62 = vst.msk [vmem:[#allocation2] sm:$0xf] %vm61, %v59
  %v63 = vld [vmem:[%s55] sm:$0xf]
  %65 = vrot.lane.b32.xlu0 %v63, 32
  %v66 = vpop.permute.xlu0 %65
  %vm68 = vcmask 388352
  %69 = vst.msk [vmem:[#allocation2 + $0x4] sm:$0xf] %vm68, %v66
  %v70 = vld [vmem:[%s55] sm:$0xf]
  %72 = vrot.lane.b32.xlu0 %v70, 31
  %v73 = vpop.permute.xlu0 %72
  %vm75 = vcmask 380160
  %76 = vst.msk [vmem:[#allocation2 + $0x8] sm:$0xf] %vm75, %v73
  %s77 = scalar_lea.vmem %s0, 12
  %v78 = vld [vmem:[%s77] sm:$0xf]
  %80 = vrot.lane.b32.xlu0 %v78, 49
  %v81 = vpop.permute.xlu0 %80
  %vm83 = vcmask 519560
  %84 = vst.msk [vmem:[#allocation2] sm:$0xf] %vm83, %v81
  %v85 = vld [vmem:[%s77] sm:$0xf]
  %87 = vrot.lane.b32.xlu0 %v85, 48
  %v88 = vpop.permute.xlu0 %87
  %vm90 = vcmask 519552
  %91 = vst.msk [vmem:[#allocation2 + $0x4] sm:$0xf] %vm90, %v88
  %v92 = vld [vmem:[%s77] sm:$0xf]
  %94 = vrot.lane.b32.xlu0 %v92, 47
  %v95 = vpop.permute.xlu0 %94
  %vm97 = vcmask 511360
  %98 = vst.msk [vmem:[#allocation2 + $0x8] sm:$0xf] %vm97, %v95
  %s99 = scalar_lea.vmem %s0, 16
  %v100 = vld [vmem:[%s99] sm:$0xf]
  %102 = vrot.lane.b32.xlu0 %v100, 65
  %v103 = vpop.permute.xlu0 %102
  %vm105 = vcmask 650760
  %106 = vst.msk [vmem:[#allocation2] sm:$0xf] %vm105, %v103
  %v107 = vld [vmem:[%s99] sm:$0xf]
  %109 = vrot.lane.b32.xlu0 %v107, 64
  %v110 = vpop.permute.xlu0 %109
  %vm112 = vcmask 650752
  %113 = vst.msk [vmem:[#allocation2 + $0x4] sm:$0xf] %vm112, %v110
  %v114 = vld [vmem:[%s99] sm:$0xf]
  %116 = vrot.lane.b32.xlu0 %v114, 63
  %v117 = vpop.permute.xlu0 %116
  %vm119 = vcmask 642560
  %120 = vst.msk [vmem:[#allocation2 + $0x8] sm:$0xf] %vm119, %v117
  %s121 = scalar_lea.vmem %s0, 20
  %v122 = vld [vmem:[%s121] sm:$0xf]
  %124 = vrot.lane.b32.xlu0 %v122, 81
  %v125 = vpop.permute.xlu0 %124
  %vm127 = vcmask 781960
  %128 = vst.msk [vmem:[#allocation2] sm:$0xf] %vm127, %v125
  %v129 = vld [vmem:[%s121] sm:$0xf]
  %131 = vrot.lane.b32.xlu0 %v129, 80
  %v132 = vpop.permute.xlu0 %131
  %vm134 = vcmask 781952
  %135 = vst.msk [vmem:[#allocation2 + $0x4] sm:$0xf] %vm134, %v132
  %v136 = vld [vmem:[%s121] sm:$0xf]
  %138 = vrot.lane.b32.xlu0 %v136, 79
  %v139 = vpop.permute.xlu0 %138
  %vm141 = vcmask 773760
  %142 = vst.msk [vmem:[#allocation2 + $0x8] sm:$0xf] %vm141, %v139
  %s143 = scalar_lea.vmem %s0, 24
  %v144 = vld [vmem:[%s143] sm:$0xf]
  %146 = vrot.lane.b32.xlu0 %v144, 97
  %v147 = vpop.permute.xlu0 %146
  %vm149 = vcmask 913160
  %150 = vst.msk [vmem:[#allocation2] sm:$0xf] %vm149, %v147
  %v151 = vld [vmem:[%s143] sm:$0xf]
  %153 = vrot.lane.b32.xlu0 %v151, 96
  %v154 = vpop.permute.xlu0 %153
  %vm156 = vcmask 913152
  %157 = vst.msk [vmem:[#allocation2 + $0x4] sm:$0xf] %vm156, %v154
  %v158 = vld [vmem:[%s143] sm:$0xf]
  %160 = vrot.lane.b32.xlu0 %v158, 95
  %v161 = vpop.permute.xlu0 %160
  %vm163 = vcmask 904960
  %164 = vst.msk [vmem:[#allocation2 + $0x8] sm:$0xf] %vm163, %v161
  %s165 = scalar_lea.vmem %s0, 28
  %v166 = vld [vmem:[%s165] sm:$0xf]
  %168 = vrot.lane.b32.xlu0 %v166, 113
  %v169 = vpop.permute.xlu0 %168
  %vm171 = vcmask 1044360
  %172 = vst.msk [vmem:[#allocation2] sm:$0xf] %vm171, %v169
  %v173 = vld [vmem:[%s165] sm:$0xf]
  %175 = vrot.lane.b32.xlu0 %v173, 112
  %v176 = vpop.permute.xlu0 %175
  %vm178 = vcmask 1044352
  %179 = vst.msk [vmem:[#allocation2 + $0x4] sm:$0xf] %vm178, %v176
  %v180 = vld [vmem:[%s165] sm:$0xf]
  %182 = vrot.lane.b32.xlu0 %v180, 111
  %v183 = vpop.permute.xlu0 %182
  %vm185 = vcmask 1036160
  %186 = vst.msk [vmem:[#allocation2 + $0x8] sm:$0xf] %vm185, %v183
  %v187 = vld [vmem:[%s1] sm:$0xff]
  %v188 = vld [vmem:[#allocation2] sm:$0xff]
  %v189 = vld [vmem:[#allocation2 + $0x8] sm:$0xf]
  %v190 = vld [vmem:[%s2] sm:$0xff]
  %192 = vset.pattern.permute.xlu0 0
  %193 = vperm.xlu0 %192, %v190
  %v194 = vpop.permute.xlu0 %193
  %vm196 = vcmask 97280
  %v198 = vsel %vm196, %v187, 0
  %vm200 = vcmask 1043456
  %v202 = vsel %vm200, %v189, 0
  %204 = vmatprep.subr.mxu0 0.0
  %205 = vmatpush1.msra.mxu0 %v188
  %206 = vmatprep.subr.mxu0 0.0
  %207 = vmatpush1.msra.mxu0 %v202
  %208 = vmatprep.subr.mxu0 0.0
  %209 = vmatpush1.msra.mxu0 0.0
  %210 = vmatprep.subr.mxu0 0.0
  %211 = vmatpush1.msra.mxu0 0.0
  %212 = vmatprep.subr.mxu0 0.0
  %213 = vmatpush1.msra.mxu0 0.0
  %214 = vmatprep.subr.mxu0 0.0
  %215 = vmatpush1.msra.mxu0 0.0
  %216 = vmatprep.subr.mxu0 0.0
  %217 = vmatpush1.msra.mxu0 0.0
  %218 = vmatprep.subr.mxu0 0.0
  %219 = vmatpush1.msra.mxu0 0.0
  %220 = vmatprep.subr.mxu0 0.0
  %221 = vmatpush1.msra.mxu0 0.0
  %222 = vmatprep.subr.mxu0 0.0
  %223 = vmatpush1.msra.mxu0 0.0
  %224 = vmatprep.subr.mxu0 0.0
  %225 = vmatpush1.msra.mxu0 0.0
  %226 = vmatprep.subr.mxu0 0.0
  %227 = vmatpush1.msra.mxu0 0.0
  %228 = vmatprep.subr.mxu0 0.0
  %229 = vmatpush1.msra.mxu0 0.0
  %230 = vmatprep.subr.mxu0 0.0
  %231 = vmatpush1.msra.mxu0 0.0
  %232 = vmatprep.subr.mxu0 0.0
  %233 = vmatpush1.msra.mxu0 0.0
  %234 = vmatprep.subr.mxu0 0.0
  %235 = vmatpush1.msra.mxu0 0.0
  %236 = vmatprep.subr.mxu0 0.0
  %237 = vmatpush1.msra.mxu0 0.0
  %238 = vmatprep.subr.mxu0 0.0
  %239 = vmatpush1.msra.mxu0 0.0
  %240 = vmatprep.subr.mxu0 0.0
  %241 = vmatpush1.msra.mxu0 0.0
  %242 = vmatprep.subr.mxu0 0.0
  %243 = vmatpush1.msra.mxu0 0.0
  %244 = vmatprep.subr.mxu0 0.0
  %245 = vmatpush1.msra.mxu0 0.0
  %246 = vmatprep.subr.mxu0 0.0
  %247 = vmatpush1.msra.mxu0 0.0
  %248 = vmatprep.subr.mxu0 0.0
  %249 = vmatpush1.msra.mxu0 0.0
  %250 = vmatprep.subr.mxu0 0.0
  %251 = vmatpush1.msra.mxu0 0.0
  %252 = vmatprep.subr.mxu0 0.0
  %253 = vmatpush1.msra.mxu0 0.0
  %254 = vmatprep.subr.mxu0 0.0
  %255 = vmatpush1.msra.mxu0 0.0
  %256 = vmatprep.subr.mxu0 0.0
  %257 = vmatpush1.msra.mxu0 0.0
  %258 = vmatprep.subr.mxu0 0.0
  %259 = vmatpush1.msra.mxu0 0.0
  %260 = vmatprep.subr.mxu0 0.0
  %261 = vmatpush1.msra.mxu0 0.0
  %262 = vmatprep.subr.mxu0 0.0
  %263 = vmatpush1.msra.mxu0 0.0
  %264 = vmatprep.subr.mxu0 0.0
  %265 = vmatpush1.msra.mxu0 0.0
  %266 = vmatprep.subr.mxu0 0.0
  %267 = vmatpush1.msra.mxu0 0.0
  %268 = vmatprep.mubr.f32.mxu0 0.0
  %269 = vmatmul.mubr.f32.gmra.mrb[0].mxu0 %v198
  %v270 = vpop.f32.mrb[0].mxu0
  %v271 = vadd.f32 %v194, %v270
  %v272 = vpop.f32.mrb[0].mxu0
  %273 = vdwg.mxu0
  %274 = vst [vmem:[%s3] sm:$0xff] %v271
  // Predicated region
  $region14: #{linear_conv.1} parent=0 // pred_check
    _
  $region15: #{linear_conv.1} parent=0 // pred_check_branch
    %276 = sbr.rel (0) target = $region17
  $region16: #{linear_conv.1} parent=0 // pred_region
    _
  $region17: #{linear_conv.1} parent=0 // pred_fallthru
    _
  // Predicated region
  $region18: #{linear_conv.1} parent=0 // pred_check
    _
  $region19: #{linear_conv.1} parent=0 // pred_check_branch
    %278 = sbr.rel (0) target = $region21
  $region20: #{linear_conv.1} parent=0 // pred_region
    _
  $region21: #{linear_conv.1} parent=0 // pred_fallthru
    _

</llo_original>
